<compile_context>
chip_gen: v7x
topology: tpu7x:2x2x1
jax: 0.10.0
libtpu: 0.0.40
codegen_flags: <defaults>
</compile_context>

<pallas_src>
import jax
import jax.numpy as jnp
from jax import lax
from jax.experimental import pallas as pl
from jax.experimental.pallas import tpu as pltpu


def _amp_mlp_kernel(x_ref, *refs):
    """Fused MLP: (Linear + LeakyReLU)* + final 1-wide Linear, all in VMEM.

    x_ref:   [bt, D]   batch-tile x features (native layout, no host transpose)
    params:  w_i [out, in], b_i [out, 1] per trunk layer, then
             w_last [h_last, 1], b_last [1, 1]
    out_ref: [1, bt]   lane-dense (batch on the 128-lane axis)
    """
    out_ref = refs[-1]
    params = refs[:-1]
    n_hidden = (len(params) - 2) // 2

    x = x_ref[...].astype(jnp.float32)                        # [bt, D]

    # First trunk layer: contract over D on both operands ("NT" matmul on the
    # MXU).  This folds the [B, D] -> [D, B] layout flip into the kernel, so
    # no separate HBM transpose/pad pass is needed in the wrapper and the
    # activations come out feature-major ([h0, bt], batch on lanes).
    w0 = params[0][...].astype(jnp.float32)                   # [h0, D]
    b0 = params[1][...].astype(jnp.float32)                   # [h0, 1]
    h = lax.dot_general(w0, x, (((1,), (1,)), ((), ())),
                        preferred_element_type=jnp.float32) + b0   # [h0, bt]
    h = jnp.maximum(h, 0.01 * h)                              # nn.LeakyReLU(0.01)

    for i in range(1, n_hidden):
        w = params[2 * i][...].astype(jnp.float32)            # [out, in]
        b = params[2 * i + 1][...].astype(jnp.float32)        # [out, 1]
        h = jnp.dot(w, h, preferred_element_type=jnp.float32) + b
        h = jnp.maximum(h, 0.01 * h)

    w_last = params[-2][...].astype(jnp.float32)              # [h_last, 1]
    b_last = params[-1][...].astype(jnp.float32)              # [1, 1]
    # Final Linear(h_last, 1): VPU multiply + cross-sublane (XLU) reduce.
    # Keeps the output lane-dense and avoids an N=1 MXU matmul.
    d = jnp.sum(h * w_last, axis=0, keepdims=True) + b_last   # [1, bt]
    out_ref[...] = d.astype(out_ref.dtype)


def _round_up(n, m):
    return ((n + m - 1) // m) * m


def _num_tensorcores():
    """Best-effort TensorCores-per-chip (>1 only on megacore parts, e.g. v7x).

    Only a perf heuristic (controls grid splitting); any failure returns 1.
    """
    try:
        kind = jax.devices()[0].device_kind.lower()
    except Exception:
        return 1
    return 2 if any(t in kind for t in ("v7", "v4", "v5p")) else 1


def _vmem_bytes_per_row(d_in, hidden_sizes, x_itemsize):
    # Double-buffered x tile + live f32 activations + double-buffered out row.
    return 2 * d_in * x_itemsize + 4 * sum(hidden_sizes) + 2 * 4


def _choose_batch_tile(batch, bytes_per_row, *, max_tile_rows,
                       vmem_budget_bytes, num_cores):
    """Largest 128-aligned tile under the VMEM budget.

    On chips with 2 TensorCores the batch axis is split into an even number
    of grid steps (>= 2) so the 'parallel' axis shards 50/50; on single-core
    chips the grid stays as small as possible (each step costs ~0.35 us).
    """
    b128 = _round_up(max(batch, 1), 128)
    cap_rows = max(128, (vmem_budget_bytes // max(bytes_per_row, 1)) // 128 * 128)
    bt = max(128, min(max_tile_rows, cap_rows, b128))
    if num_cores >= 2 and b128 >= 2 * 128:
        steps = -(-b128 // bt)
        if steps % 2:
            steps += 1                                # even step count (>= 2)
            bt = max(128, _round_up(-(-b128 // steps), 128))
    return bt


def amp_discriminator_forward(x, weights, biases, *, max_batch_tile=4096,
                              vmem_budget_bytes=12 * 1024 * 1024,
                              use_bf16_inputs=False, num_tensorcores=None):
    """AMPDiscriminator.forward.

    x:       [B, input_dim]
    weights: list of [out_i, in_i] arrays (PyTorch nn.Linear layout)
    biases:  list of [out_i] arrays
    returns: [B, 1] float32  ==  amp_linear(trunk(x))
    """
    B, D = x.shape
    assert len(weights) >= 2 and weights[-1].shape[0] == 1
    hidden_sizes = [w.shape[0] for w in weights[:-1]]

    if use_bf16_inputs:
        # Halves the dominant HBM stream (x is >95% of bytes); accumulation
        # stays f32 inside the kernel.  Off by default to match nn.Linear.
        x = x.astype(jnp.bfloat16)

    if num_tensorcores is None:
        num_tensorcores = _num_tensorcores()

    x_itemsize = jnp.dtype(x.dtype).itemsize
    bytes_per_row = _vmem_bytes_per_row(D, hidden_sizes, x_itemsize)
    bt = _choose_batch_tile(B, bytes_per_row,
                            max_tile_rows=max_batch_tile,
                            vmem_budget_bytes=vmem_budget_bytes,
                            num_cores=num_tensorcores)
    grid = pl.cdiv(B, bt)

    # x in its native [B, D] layout: no host-side transpose or pad.  The last
    # (ragged) tile reads out-of-range garbage rows; every kernel op is
    # per-batch-column, so garbage stays confined to output lanes that the
    # masked output store discards.
    in_specs = [pl.BlockSpec((bt, D), lambda i: (i, 0))]
    param_args = []
    for w, b in zip(weights[:-1], biases[:-1]):
        b2 = b.reshape(-1, 1)
        param_args += [w, b2]
        in_specs += [
            pl.BlockSpec(w.shape, lambda i: (0, 0)),   # constant index -> resident in VMEM
            pl.BlockSpec(b2.shape, lambda i: (0, 0)),
        ]
    w_last = weights[-1].reshape(-1, 1)                # [h_last, 1]
    b_last = biases[-1].reshape(1, 1)                  # [1, 1]
    param_args += [w_last, b_last]
    in_specs += [
        pl.BlockSpec(w_last.shape, lambda i: (0, 0)),
        pl.BlockSpec(b_last.shape, lambda i: (0, 0)),
    ]

    out_spec = pl.BlockSpec((1, bt), lambda i: (0, i))

    flops = sum(2 * B * w.shape[0] * w.shape[1] for w in weights)
    bytes_accessed = x.size * x_itemsize + 4 * B + sum(
        4 * (w.size + b.size) for w, b in zip(weights, biases))

    # Explicit VMEM cap: never below the smallest default scoped limit
    # (16 MiB on v5e) and never above 32 MiB, which is safe on every
    # generation including v7x's 64 MiB physical VMEM.
    est_tile_bytes = bt * bytes_per_row + 64 * 1024    # + resident weights/biases
    vmem_limit = int(min(32 * 1024 * 1024,
                         max(16 * 1024 * 1024, 2 * est_tile_bytes)))

    out = pl.pallas_call(
        _amp_mlp_kernel,
        out_shape=jax.ShapeDtypeStruct((1, B), jnp.float32),
        grid=(grid,),
        in_specs=in_specs,
        out_specs=out_spec,
        compiler_params=pltpu.CompilerParams(
            dimension_semantics=("parallel",),
            vmem_limit_bytes=vmem_limit),
        cost_estimate=pl.CostEstimate(
            flops=int(flops), transcendentals=0,
            bytes_accessed=int(bytes_accessed)),
    )(x, *param_args)

    return out[0].reshape(B, 1)


def init_linear_params(key, in_dim, out_dim):
    """Deterministic init mimicking torch.nn.Linear defaults (torch layout)."""
    kw, kb = jax.random.split(key)
    bound = 1.0 / jnp.sqrt(jnp.float32(in_dim))
    w = jax.random.uniform(kw, (out_dim, in_dim), jnp.float32, -bound, bound)
    b = jax.random.uniform(kb, (out_dim,), jnp.float32, -bound, bound)
    return w, b


def reference_forward(x, weights, biases):
    h = x
    n = len(weights)
    for i, (w, b) in enumerate(zip(weights, biases)):
        h = h @ w.T + b
        if i < n - 1:
            h = jnp.where(h > 0, h, 0.01 * h)
    return h


if __name__ == "__main__":
    # Small shapes consistent with the module: input_dim = 64 (state ++
    # next_state already concatenated), hidden_layer_sizes = [32, 32].
    input_dim = 64
    hidden_layer_sizes = [32, 32]

    key = jax.random.PRNGKey(0)
    keys = jax.random.split(key, len(hidden_layer_sizes) + 4)

    weights, biases = [], []
    curr = input_dim
    for i, hdim in enumerate(hidden_layer_sizes):
        w, b = init_linear_params(keys[i], curr, hdim)
        weights.append(w)
        biases.append(b)
        curr = hdim
    w_out, b_out = init_linear_params(keys[len(hidden_layer_sizes)], curr, 1)
    weights.append(w_out)
    biases.append(b_out)

    # batch=16: tiny batch, single partial tile.  batch=300: non-multiple-of-128
    # batch -> ragged edge block (and a 2-step balanced "parallel" grid on
    # megacore chips).  No host-side transpose or pad in either case.
    for bi, batch in enumerate((16, 300)):
        x = jax.random.normal(keys[-1 - bi], (batch, input_dim), jnp.float32)
        d = jax.block_until_ready(amp_discriminator_forward(x, weights, biases))
        d_ref = reference_forward(x, weights, biases)
        assert d.shape == (batch, 1)
        assert jnp.allclose(d, d_ref, atol=1e-4, rtol=1e-4), (
            f"batch={batch}: max abs err {jnp.max(jnp.abs(d - d_ref))}")

    # Optional bf16-input path (halved HBM traffic, f32 accumulation): relaxed
    # tolerance since x is quantized to bf16 before the first matmul.
    x = jax.random.normal(keys[-3], (300, input_dim), jnp.float32)
    d_bf16 = jax.block_until_ready(
        amp_discriminator_forward(x, weights, biases, use_bf16_inputs=True))
    d_ref = reference_forward(x, weights, biases)
    assert d_bf16.shape == (300, 1)
    assert jnp.allclose(d_bf16, d_ref, atol=5e-2, rtol=5e-2), (
        f"bf16 path: max abs err {jnp.max(jnp.abs(d_bf16 - d_ref))}")

    # TODO(synk): compute_grad_pen / predict_amp_reward involve autograd and
    # host-side normalizers; only the forward hot path is kernelized here.
    print("KERNEL_OK")
</pallas_src>

<mosaic_0001>
module attributes {stable_mosaic.version = 11 : i64} {
  func.func @_amp_mlp_kernel(%arg0: i32, %arg1: memref<128x64xf32, #tpu.memory_space<vmem>>, %arg2: memref<32x64xf32, #tpu.memory_space<vmem>>, %arg3: memref<32x1xf32, #tpu.memory_space<vmem>>, %arg4: memref<32x32xf32, #tpu.memory_space<vmem>>, %arg5: memref<32x1xf32, #tpu.memory_space<vmem>>, %arg6: memref<32x1xf32, #tpu.memory_space<vmem>>, %arg7: memref<1x1xf32, #tpu.memory_space<vmem>>, %arg8: memref<1x128xf32, #tpu.memory_space<vmem>>) attributes {dimension_semantics = [#tpu.dimension_semantics<parallel>], iteration_bounds = array<i64: 1>, scalar_prefetch = 0 : i64, scratch_operands = 0 : i64, tpu.core_type = #tpu.core_type<tc>, window_params = [{transform_indices = @transform_0, window_bounds = array<i64: 128, 64>}, {pipeline_mode = #tpu.pipeline_mode<synchronous>, transform_indices = @transform_1, window_bounds = array<i64: 32, 64>}, {pipeline_mode = #tpu.pipeline_mode<synchronous>, transform_indices = @transform_2, window_bounds = array<i64: 32, 1>}, {pipeline_mode = #tpu.pipeline_mode<synchronous>, transform_indices = @transform_3, window_bounds = array<i64: 32, 32>}, {pipeline_mode = #tpu.pipeline_mode<synchronous>, transform_indices = @transform_4, window_bounds = array<i64: 32, 1>}, {pipeline_mode = #tpu.pipeline_mode<synchronous>, transform_indices = @transform_5, window_bounds = array<i64: 32, 1>}, {pipeline_mode = #tpu.pipeline_mode<synchronous>, transform_indices = @transform_6, window_bounds = array<i64: 1, 1>}, {transform_indices = @transform_7, window_bounds = array<i64: 1, 128>}]} {
    %c0 = arith.constant 0 : index
    %c0_0 = arith.constant 0 : index
    %0 = vector.load %arg1[%c0, %c0_0] : memref<128x64xf32, #tpu.memory_space<vmem>>, vector<128x64xf32>
    %c0_1 = arith.constant 0 : index
    %c0_2 = arith.constant 0 : index
    %1 = vector.load %arg2[%c0_1, %c0_2] : memref<32x64xf32, #tpu.memory_space<vmem>>, vector<32x64xf32>
    %c0_3 = arith.constant 0 : index
    %c0_4 = arith.constant 0 : index
    %2 = vector.load %arg3[%c0_3, %c0_4] : memref<32x1xf32, #tpu.memory_space<vmem>>, vector<32x1xf32>
    %cst = arith.constant dense<0.000000e+00> : vector<32x128xf32>
    %3 = tpu.matmul %1, %0, %cst {dimension_numbers = #tpu.dot_dimension_numbers<[1], [1], [0], [0], [0, 0, 1, 0], [], []>} : vector<32x64xf32>, vector<128x64xf32>, vector<32x128xf32> -> vector<32x128xf32>
    %4 = vector.broadcast %2 : vector<32x1xf32> to vector<32x128xf32>
    %5 = arith.addf %3, %4 : vector<32x128xf32>
    %cst_5 = arith.constant 0.00999999977 : f32
    %6 = vector.broadcast %cst_5 : f32 to vector<32x128xf32>
    %7 = arith.mulf %6, %5 : vector<32x128xf32>
    %8 = arith.maximumf %5, %7 : vector<32x128xf32>
    %c0_6 = arith.constant 0 : index
    %c0_7 = arith.constant 0 : index
    %9 = vector.load %arg4[%c0_6, %c0_7] : memref<32x32xf32, #tpu.memory_space<vmem>>, vector<32x32xf32>
    %c0_8 = arith.constant 0 : index
    %c0_9 = arith.constant 0 : index
    %10 = vector.load %arg5[%c0_8, %c0_9] : memref<32x1xf32, #tpu.memory_space<vmem>>, vector<32x1xf32>
    %cst_10 = arith.constant dense<0.000000e+00> : vector<32x128xf32>
    %11 = tpu.matmul %9, %8, %cst_10 {dimension_numbers = #tpu.dot_dimension_numbers<[1], [0], [0], [1], [0, 0, 1, 1], [], []>} : vector<32x32xf32>, vector<32x128xf32>, vector<32x128xf32> -> vector<32x128xf32>
    %12 = vector.broadcast %10 : vector<32x1xf32> to vector<32x128xf32>
    %13 = arith.addf %11, %12 : vector<32x128xf32>
    %cst_11 = arith.constant 0.00999999977 : f32
    %14 = vector.broadcast %cst_11 : f32 to vector<32x128xf32>
    %15 = arith.mulf %14, %13 : vector<32x128xf32>
    %16 = arith.maximumf %13, %15 : vector<32x128xf32>
    %c0_12 = arith.constant 0 : index
    %c0_13 = arith.constant 0 : index
    %17 = vector.load %arg6[%c0_12, %c0_13] : memref<32x1xf32, #tpu.memory_space<vmem>>, vector<32x1xf32>
    %c0_14 = arith.constant 0 : index
    %c0_15 = arith.constant 0 : index
    %18 = vector.load %arg7[%c0_14, %c0_15] : memref<1x1xf32, #tpu.memory_space<vmem>>, vector<1x1xf32>
    %19 = vector.broadcast %17 : vector<32x1xf32> to vector<32x128xf32>
    %20 = arith.mulf %16, %19 : vector<32x128xf32>
    %cst_16 = arith.constant dense<0.000000e+00> : vector<128xf32>
    %21 = vector.multi_reduction <add>, %20, %cst_16 [0] : vector<32x128xf32> to vector<128xf32>
    %22 = vector.shape_cast %21 : vector<128xf32> to vector<1x128xf32>
    %23 = vector.broadcast %18 : vector<1x1xf32> to vector<1x128xf32>
    %24 = arith.addf %22, %23 : vector<1x128xf32>
    %c0_17 = arith.constant 0 : index
    %c0_18 = arith.constant 0 : index
    %25 = vector.load %arg8[%c0_17, %c0_18] : memref<1x128xf32, #tpu.memory_space<vmem>>, vector<1x128xf32>
    tpu.vector_store %arg8[%c0_17, %c0_18], %24 {strides = array<i32>} : memref<1x128xf32, #tpu.memory_space<vmem>>, vector<1x128xf32>,
    return
  }
  func.func @transform_0(%arg0: i32) -> (i32, i32) {
    %c0_i32 = arith.constant 0 : i32
    %c0_i32_0 = arith.constant 0 : i32
    return %arg0, %c0_i32 : i32, i32
  }
  func.func @transform_1(%arg0: i32) -> (i32, i32) {
    %c0_i32 = arith.constant 0 : i32
    %c0_i32_0 = arith.constant 0 : i32
    %c0_i32_1 = arith.constant 0 : i32
    return %c0_i32, %c0_i32_0 : i32, i32
  }
  func.func @transform_2(%arg0: i32) -> (i32, i32) {
    %c0_i32 = arith.constant 0 : i32
    %c0_i32_0 = arith.constant 0 : i32
    %c0_i32_1 = arith.constant 0 : i32
    return %c0_i32, %c0_i32_0 : i32, i32
  }
  func.func @transform_3(%arg0: i32) -> (i32, i32) {
    %c0_i32 = arith.constant 0 : i32
    %c0_i32_0 = arith.constant 0 : i32
    %c0_i32_1 = arith.constant 0 : i32
    return %c0_i32, %c0_i32_0 : i32, i32
  }
  func.func @transform_4(%arg0: i32) -> (i32, i32) {
    %c0_i32 = arith.constant 0 : i32
    %c0_i32_0 = arith.constant 0 : i32
    %c0_i32_1 = arith.constant 0 : i32
    return %c0_i32, %c0_i32_0 : i32, i32
  }
  func.func @transform_5(%arg0: i32) -> (i32, i32) {
    %c0_i32 = arith.constant 0 : i32
    %c0_i32_0 = arith.constant 0 : i32
    %c0_i32_1 = arith.constant 0 : i32
    return %c0_i32, %c0_i32_0 : i32, i32
  }
  func.func @transform_6(%arg0: i32) -> (i32, i32) {
    %c0_i32 = arith.constant 0 : i32
    %c0_i32_0 = arith.constant 0 : i32
    %c0_i32_1 = arith.constant 0 : i32
    return %c0_i32, %c0_i32_0 : i32, i32
  }
  func.func @transform_7(%arg0: i32) -> (i32, i32) {
    %c0_i32 = arith.constant 0 : i32
    %c0_i32_0 = arith.constant 0 : i32
    return %c0_i32, %arg0 : i32, i32
  }
}

</mosaic_0001>

<llo_original>
// kernel: tpu_custom_call.1
$region0: #{tpu_custom_call.1}
  #allocation0 [shape = 'u32[]', space=smem, size = 0x4, offset = 0x4, fixed_abs, tag = 'smem constant byte address 0x4 - core index']
  #allocation1 [shape = 'u32[144,128]{1,0:T(1,128)}', space=vmem, size = 0x12000, scoped, tag = 'internal scratch']
  #allocation2 [shape = 'f32[1,1]{1,0:T(1,128)S(1)}', space=vmem, size = 0x200, scoped, tag = 'scoped memory for tpu_custom_call.1']
  %s0 = inlined_call_operand.vmem [shape: f32[16,64], index: 0, kind: input, shape index: {}]
  %s1 = inlined_call_operand.vmem [shape: f32[32,64], index: 1, kind: input, shape index: {}]
  %s2 = inlined_call_operand.vmem [shape: f32[32,1], index: 2, kind: input, shape index: {}]
  %s3 = inlined_call_operand.vmem [shape: f32[32,32], index: 3, kind: input, shape index: {}]
  %s4 = inlined_call_operand.vmem [shape: f32[32,1], index: 4, kind: input, shape index: {}]
  %s5 = inlined_call_operand.vmem [shape: f32[32,1], index: 5, kind: input, shape index: {}]
  %s6 = inlined_call_operand.<no memory space> [shape: f32[1,1], index: 6, kind: input, shape index: {}]
  %s7 = inlined_call_operand.hbm [shape: f32[1,16], index: 7, kind: output, shape index: {}]
  %s8 = sld [smem:[#allocation0]]
  $region38: #{tpu_custom_call.1} parent=0
    _
  %s10 = ssub.s32 1, %s8
  %s11 = scalar_select 0, %s10, %s8
  %v12 = vstv %s6
  %13 = vst [vmem:[#allocation2] sm:$0x1] %v12
  $region1: #{tpu_custom_call.1} parent=0
    #allocation3 [shape = 'u8[512]{0}', space=vmem, size = 0x400, scoped, tag = 'output window, operand 0, single buffered']
    #allocation4 [shape = 's32[1]{0}', space=sflag, size = 0x4, scoped, tag = 'scoped memory for tpu_custom_call.1']
    %14 = vsyncpa [#allocation4], 0
    // Predicated region
    $region2: #{tpu_custom_call.1} parent=1 // pred_check
      _
    $region3: #{tpu_custom_call.1} parent=1 // pred_check_branch
      %16 = sbr.rel (0) target = $region5
    $region4: #{tpu_custom_call.1} parent=1 // pred_region
      _
    $region5: #{tpu_custom_call.1} parent=1 // pred_fallthru
      _
    // Predicated region
    $region6: #{tpu_custom_call.1} parent=1 // pred_check
      _
    $region7: #{tpu_custom_call.1} parent=1 // pred_check_branch
      %18 = sbr.rel (0) target = $region9
    $region8: #{tpu_custom_call.1} parent=1 // pred_region
      _
    $region9: #{tpu_custom_call.1} parent=1 // pred_fallthru
      _
    // Predicated region
    $region10: #{tpu_custom_call.1} parent=1 // pred_check
      _
    $region11: #{tpu_custom_call.1} parent=1 // pred_check_branch
      %20 = sbr.rel (0) target = $region13
    $region12: #{tpu_custom_call.1} parent=1 // pred_region
      _
    $region13: #{tpu_custom_call.1} parent=1 // pred_fallthru
      _
    // Predicated region
    $region14: #{tpu_custom_call.1} parent=1 // pred_check
      _
    $region15: #{tpu_custom_call.1} parent=1 // pred_check_branch
      %22 = sbr.rel (0) target = $region17
    $region16: #{tpu_custom_call.1} parent=1 // pred_region
      _
    $region17: #{tpu_custom_call.1} parent=1 // pred_fallthru
      _
    // Predicated region
    $region18: #{tpu_custom_call.1} parent=1 // pred_check
      _
    $region19: #{tpu_custom_call.1} parent=1 // pred_check_branch
      %24 = sbr.rel (0) target = $region21
    $region20: #{tpu_custom_call.1} parent=1 // pred_region
      _
    $region21: #{tpu_custom_call.1} parent=1 // pred_fallthru
      _
    // Predicated region
    $region22: #{tpu_custom_call.1} parent=1 // pred_check
      _
    $region23: #{tpu_custom_call.1} parent=1 // pred_check_branch
      %26 = sbr.rel (0) target = $region25
    $region24: #{tpu_custom_call.1} parent=1 // pred_region
      _
    $region25: #{tpu_custom_call.1} parent=1 // pred_fallthru
      _
    // Predicated region
    $region26: #{tpu_custom_call.1} parent=1 // pred_check
      _
    $region27: #{tpu_custom_call.1} parent=1 // pred_check_branch
      %28 = sbr.rel (0) target = $region29
    $region28: #{tpu_custom_call.1} parent=1 // pred_region
      _
    $region29: #{tpu_custom_call.1} parent=1 // pred_fallthru
      _
    %v29 = vld [vmem:[%s0] sm:$0xff]
    %v30 = vld [vmem:[%s0 + $0x8] sm:$0xff]
    %v31 = vld [vmem:[%s0 + $0x10] sm:$0xff]
    %v32 = vld [vmem:[%s0 + $0x18] sm:$0xff]
    %v33 = vld [vmem:[%s0 + $0x20] sm:$0xff]
    %v34 = vld [vmem:[%s0 + $0x28] sm:$0xff]
    %v35 = vld [vmem:[%s0 + $0x30] sm:$0xff]
    %v36 = vld [vmem:[%s0 + $0x38] sm:$0xff]
    %v37 = vld [vmem:[%s0 + $0x40] sm:$0xff]
    %v38 = vld [vmem:[%s0 + $0x48] sm:$0xff]
    %v39 = vld [vmem:[%s0 + $0x50] sm:$0xff]
    %v40 = vld [vmem:[%s0 + $0x58] sm:$0xff]
    %v41 = vld [vmem:[%s0 + $0x60] sm:$0xff]
    %v42 = vld [vmem:[%s0 + $0x68] sm:$0xff]
    %v43 = vld [vmem:[%s0 + $0x70] sm:$0xff]
    %v44 = vld [vmem:[%s0 + $0x78] sm:$0xff]
    %v45 = vld [vmem:[%s1] sm:$0xff]
    %v46 = vld [vmem:[%s1 + $0x8] sm:$0xff]
    %v47 = vld [vmem:[%s1 + $0x10] sm:$0xff]
    %v48 = vld [vmem:[%s1 + $0x18] sm:$0xff]
    %v49 = vld [vmem:[%s2] sm:$0xff]
    %v50 = vld [vmem:[%s2 + $0x8] sm:$0xff]
    %v51 = vld [vmem:[%s2 + $0x10] sm:$0xff]
    %v52 = vld [vmem:[%s2 + $0x18] sm:$0xff]
    %54 = vset.pattern.permute.xlu0 0
    %55 = vperm.xlu0 %54, %v49
    %v56 = vpop.permute.xlu0 %55
    %59 = vset.pattern.permute.xlu0 0
    %60 = vperm.xlu0 %59, %v50
    %v61 = vpop.permute.xlu0 %60
    %64 = vset.pattern.permute.xlu0 0
    %65 = vperm.xlu0 %64, %v51
    %v66 = vpop.permute.xlu0 %65
    %69 = vset.pattern.permute.xlu0 0
    %70 = vperm.xlu0 %69, %v52
    %v71 = vpop.permute.xlu0 %70
    %vm73 = vcmask 523264
    %v75 = vsel %vm73, %v45, 0
    %v78 = vsel %vm73, %v46, 0
    %v81 = vsel %vm73, %v47, 0
    %v84 = vsel %vm73, %v48, 0
    %v87 = vsel %vm73, %v29, 0
    %v90 = vsel %vm73, %v30, 0
    %v93 = vsel %vm73, %v31, 0
    %v96 = vsel %vm73, %v32, 0
    %v99 = vsel %vm73, %v33, 0
    %v102 = vsel %vm73, %v34, 0
    %v105 = vsel %vm73, %v35, 0
    %v108 = vsel %vm73, %v36, 0
    %v111 = vsel %vm73, %v37, 0
    %v114 = vsel %vm73, %v38, 0
    %v117 = vsel %vm73, %v39, 0
    %v120 = vsel %vm73, %v40, 0
    %v123 = vsel %vm73, %v41, 0
    %v126 = vsel %vm73, %v42, 0
    %v129 = vsel %vm73, %v43, 0
    %v132 = vsel %vm73, %v44, 0
    %134 = vmatprep.subr.mxu0 0.0
    %135 = vmatpush1.xpose.msra.mxu0 %v87
    %136 = vmatprep.subr.mxu0 0.0
    %137 = vmatpush1.xpose.msra.mxu0 %v90
    %138 = vmatprep.subr.mxu0 0.0
    %139 = vmatpush1.xpose.msra.mxu0 %v93
    %140 = vmatprep.subr.mxu0 0.0
    %141 = vmatpush1.xpose.msra.mxu0 %v96
    %142 = vmatprep.subr.mxu0 0.0
    %143 = vmatpush1.xpose.msra.mxu0 %v99
    %144 = vmatprep.subr.mxu0 0.0
    %145 = vmatpush1.xpose.msra.mxu0 %v102
    %146 = vmatprep.subr.mxu0 0.0
    %147 = vmatpush1.xpose.msra.mxu0 %v105
    %148 = vmatprep.subr.mxu0 0.0
    %149 = vmatpush1.xpose.msra.mxu0 %v108
    %150 = vmatprep.subr.mxu0 0.0
    %151 = vmatpush1.xpose.msra.mxu0 %v111
    %152 = vmatprep.subr.mxu0 0.0
    %153 = vmatpush1.xpose.msra.mxu0 %v114
    %154 = vmatprep.subr.mxu0 0.0
    %155 = vmatpush1.xpose.msra.mxu0 %v117
    %156 = vmatprep.subr.mxu0 0.0
    %157 = vmatpush1.xpose.msra.mxu0 %v120
    %158 = vmatprep.subr.mxu0 0.0
    %159 = vmatpush1.xpose.msra.mxu0 %v123
    %160 = vmatprep.subr.mxu0 0.0
    %161 = vmatpush1.xpose.msra.mxu0 %v126
    %162 = vmatprep.subr.mxu0 0.0
    %163 = vmatpush1.xpose.msra.mxu0 %v129
    %164 = vmatprep.subr.mxu0 0.0
    %165 = vmatpush1.xpose.msra.mxu0 %v132
    %166 = vmatprep.subr.mxu0 0.0
    %167 = vmatpush1.xpose.msra.mxu0 0.0
    %168 = vmatprep.subr.mxu0 0.0
    %169 = vmatpush1.xpose.msra.mxu0 0.0
    %170 = vmatprep.subr.mxu0 0.0
    %171 = vmatpush1.xpose.msra.mxu0 0.0
    %172 = vmatprep.subr.mxu0 0.0
    %173 = vmatpush1.xpose.msra.mxu0 0.0
    %174 = vmatprep.subr.mxu0 0.0
    %175 = vmatpush1.xpose.msra.mxu0 0.0
    %176 = vmatprep.subr.mxu0 0.0
    %177 = vmatpush1.xpose.msra.mxu0 0.0
    %178 = vmatprep.subr.mxu0 0.0
    %179 = vmatpush1.xpose.msra.mxu0 0.0
    %180 = vmatprep.subr.mxu0 0.0
    %181 = vmatpush1.xpose.msra.mxu0 0.0
    %182 = vmatprep.subr.mxu0 0.0
    %183 = vmatpush1.xpose.msra.mxu0 0.0
    %184 = vmatprep.subr.mxu0 0.0
    %185 = vmatpush1.xpose.msra.mxu0 0.0
    %186 = vmatprep.subr.mxu0 0.0
    %187 = vmatpush1.xpose.msra.mxu0 0.0
    %188 = vmatprep.subr.mxu0 0.0
    %189 = vmatpush1.xpose.msra.mxu0 0.0
    %190 = vmatprep.subr.mxu0 0.0
    %191 = vmatpush1.xpose.msra.mxu0 0.0
    %192 = vmatprep.subr.mxu0 0.0
    %193 = vmatpush1.xpose.msra.mxu0 0.0
    %194 = vmatprep.subr.mxu0 0.0
    %195 = vmatpush1.xpose.msra.mxu0 0.0
    %196 = vmatprep.subr.mxu0 0.0
    %197 = vmatpush1.xpose.msra.mxu0 0.0
    %198 = vmatprep.mubr.f32.mxu0 0.0
    %199 = vmatmul.mubr.f32.gmra.mrb[0].mxu0 %v75
    %v200 = vpop.f32.mrb[0].mxu0
    %v201 = vadd.f32 %v56, %v200
    %v202 = vpop.f32.mrb[0].mxu0
    %203 = vmatprep.mubr.f32.mxu0 0.0
    %204 = vmatmul.mubr.f32.gmra.mrb[0].mxu0 %v78
    %v205 = vpop.f32.mrb[0].mxu0
    %v206 = vadd.f32 %v61, %v205
    %v207 = vpop.f32.mrb[0].mxu0
    %208 = vmatprep.mubr.f32.mxu0 0.0
    %209 = vmatmul.mubr.f32.gmra.mrb[0].mxu0 %v81
    %v210 = vpop.f32.mrb[0].mxu0
    %v211 = vadd.f32 %v66, %v210
    %v212 = vpop.f32.mrb[0].mxu0
    %213 = vmatprep.mubr.f32.mxu0 0.0
    %214 = vmatmul.mubr.f32.gmra.mrb[0].mxu0 %v84
    %v215 = vpop.f32.mrb[0].mxu0
    %v216 = vadd.f32 %v71, %v215
    %v217 = vpop.f32.mrb[0].mxu0
    %218 = vdwg.mxu0
    %v219 = vmul.f32 %v201, 0.01
    %v220 = vmul.f32 %v206, 0.01
    %v221 = vmul.f32 %v211, 0.01
    %v222 = vmul.f32 %v216, 0.01
    %v223 = vmax.f32 %v201, %v219
    %v224 = vmax.f32 %v206, %v220
    %v225 = vmax.f32 %v211, %v221
    %v226 = vmax.f32 %v216, %v222
    %v227 = vld [vmem:[%s3] sm:$0xff]
    %v228 = vld [vmem:[%s3 + $0x8] sm:$0xff]
    %v229 = vld [vmem:[%s3 + $0x10] sm:$0xff]
    %v230 = vld [vmem:[%s3 + $0x18] sm:$0xff]
    %v231 = vld [vmem:[%s4] sm:$0xff]
    %v232 = vld [vmem:[%s4 + $0x8] sm:$0xff]
    %v233 = vld [vmem:[%s4 + $0x10] sm:$0xff]
    %v234 = vld [vmem:[%s4 + $0x18] sm:$0xff]
    %236 = vset.pattern.permute.xlu0 0
    %237 = vperm.xlu0 %236, %v231
    %v238 = vpop.permute.xlu0 %237
    %241 = vset.pattern.permute.xlu0 0
    %242 = vperm.xlu0 %241, %v232
    %v243 = vpop.permute.xlu0 %242
    %246 = vset.pattern.permute.xlu0 0
    %247 = vperm.xlu0 %246, %v233
    %v248 = vpop.permute.xlu0 %247
    %251 = vset.pattern.permute.xlu0 0
    %252 = vperm.xlu0 %251, %v234
    %v253 = vpop.permute.xlu0 %252
    %vm255 = vcmask 261120
    %v257 = vsel %vm255, %v227, 0
    %v260 = vsel %vm255, %v228, 0
    %v263 = vsel %vm255, %v229, 0
    %v266 = vsel %vm255, %v230, 0
    %268 = vmatprep.subr.mxu0 0.0
    %269 = vmatpush1.msra.mxu0 %v223
    %270 = vmatprep.subr.mxu0 0.0
    %271 = vmatpush1.msra.mxu0 %v224
    %272 = vmatprep.subr.mxu0 0.0
    %273 = vmatpush1.msra.mxu0 %v225
    %274 = vmatprep.subr.mxu0 0.0
    %275 = vmatpush1.msra.mxu0 %v226
    %276 = vmatprep.subr.mxu0 0.0
    %277 = vmatpush1.msra.mxu0 0.0
    %278 = vmatprep.subr.mxu0 0.0
    %279 = vmatpush1.msra.mxu0 0.0
    %280 = vmatprep.subr.mxu0 0.0
    %281 = vmatpush1.msra.mxu0 0.0
    %282 = vmatprep.subr.mxu0 0.0
    %283 = vmatpush1.msra.mxu0 0.0
    %284 = vmatprep.subr.mxu0 0.0
    %285 = vmatpush1.msra.mxu0 0.0
    %286 = vmatprep.subr.mxu0 0.0
    %287 = vmatpush1.msra.mxu0 0.0
    %288 = vmatprep.subr.mxu0 0.0
    %289 = vmatpush1.msra.mxu0 0.0
    %290 = vmatprep.subr.mxu0 0.0
    %291 = vmatpush1.msra.mxu0 0.0
    %292 = vmatprep.subr.mxu0 0.0
    %293 = vmatpush1.msra.mxu0 0.0
    %294 = vmatprep.subr.mxu0 0.0
    %295 = vmatpush1.msra.mxu0 0.0
    %296 = vmatprep.subr.mxu0 0.0
    %297 = vmatpush1.msra.mxu0 0.0
    %298 = vmatprep.subr.mxu0 0.0
    %299 = vmatpush1.msra.mxu0 0.0
    %300 = vmatprep.subr.mxu0 0.0
    %301 = vmatpush1.msra.mxu0 0.0
    %302 = vmatprep.subr.mxu0 0.0
    %303 = vmatpush1.msra.mxu0 0.0
    %304 = vmatprep.subr.mxu0 0.0
    %305 = vmatpush1.msra.mxu0 0.0
    %306 = vmatprep.subr.mxu0 0.0
    %307 = vmatpush1.msra.mxu0 0.0
    %308 = vmatprep.subr.mxu0 0.0
    %309 = vmatpush1.msra.mxu0 0.0
    %310 = vmatprep.subr.mxu0 0.0
    %311 = vmatpush1.msra.mxu0 0.0
    %312 = vmatprep.subr.mxu0 0.0
    %313 = vmatpush1.msra.mxu0 0.0
    %314 = vmatprep.subr.mxu0 0.0
    %315 = vmatpush1.msra.mxu0 0.0
    %316 = vmatprep.subr.mxu0 0.0
    %317 = vmatpush1.msra.mxu0 0.0
    %318 = vmatprep.subr.mxu0 0.0
    %319 = vmatpush1.msra.mxu0 0.0
    %320 = vmatprep.subr.mxu0 0.0
    %321 = vmatpush1.msra.mxu0 0.0
    %322 = vmatprep.subr.mxu0 0.0
    %323 = vmatpush1.msra.mxu0 0.0
    %324 = vmatprep.subr.mxu0 0.0
    %325 = vmatpush1.msra.mxu0 0.0
    %326 = vmatprep.subr.mxu0 0.0
    %327 = vmatpush1.msra.mxu0 0.0
    %328 = vmatprep.subr.mxu0 0.0
    %329 = vmatpush1.msra.mxu0 0.0
    %330 = vmatprep.subr.mxu0 0.0
    %331 = vmatpush1.msra.mxu0 0.0
    %332 = vmatprep.mubr.f32.mxu0 0.0
    %333 = vmatmul.mubr.f32.gmra.mrb[0].mxu0 %v257
    %v334 = vpop.f32.mrb[0].mxu0
    %v335 = vadd.f32 %v238, %v334
    %v336 = vpop.f32.mrb[0].mxu0
    %337 = vmatprep.mubr.f32.mxu0 0.0
    %338 = vmatmul.mubr.f32.gmra.mrb[0].mxu0 %v260
    %v339 = vpop.f32.mrb[0].mxu0
    %v340 = vadd.f32 %v243, %v339
    %v341 = vpop.f32.mrb[0].mxu0
    %342 = vmatprep.mubr.f32.mxu0 0.0
    %343 = vmatmul.mubr.f32.gmra.mrb[0].mxu0 %v263
    %v344 = vpop.f32.mrb[0].mxu0
    %v345 = vadd.f32 %v248, %v344
    %v346 = vpop.f32.mrb[0].mxu0
    %347 = vmatprep.mubr.f32.mxu0 0.0
    %348 = vmatmul.mubr.f32.gmra.mrb[0].mxu0 %v266
    %v349 = vpop.f32.mrb[0].mxu0
    %v350 = vadd.f32 %v253, %v349
    %v351 = vpop.f32.mrb[0].mxu0
    %352 = vdwg.mxu0
    %v353 = vmul.f32 %v335, 0.01
    %v354 = vmul.f32 %v340, 0.01
    %v355 = vmul.f32 %v345, 0.01
    %v356 = vmul.f32 %v350, 0.01
    %v357 = vmax.f32 %v335, %v353
    %v358 = vmax.f32 %v340, %v354
    %v359 = vmax.f32 %v345, %v355
    %v360 = vmax.f32 %v350, %v356
    %v361 = vld [vmem:[%s5] sm:$0xff]
    %v362 = vld [vmem:[%s5 + $0x8] sm:$0xff]
    %v363 = vld [vmem:[%s5 + $0x10] sm:$0xff]
    %v364 = vld [vmem:[%s5 + $0x18] sm:$0xff]
    %v365 = vld [vmem:[#allocation2] sm:$0x1]
    %367 = vset.pattern.permute.xlu0 0
    %368 = vperm.xlu0 %367, %v361
    %v369 = vpop.permute.xlu0 %368
    %372 = vset.pattern.permute.xlu0 0
    %373 = vperm.xlu0 %372, %v362
    %v374 = vpop.permute.xlu0 %373
    %377 = vset.pattern.permute.xlu0 0
    %378 = vperm.xlu0 %377, %v363
    %v379 = vpop.permute.xlu0 %378
    %382 = vset.pattern.permute.xlu0 0
    %383 = vperm.xlu0 %382, %v364
    %v384 = vpop.permute.xlu0 %383
    %v386 = vmul.f32 %v357, %v369
    %v387 = vmul.f32 %v358, %v374
    %v388 = vmul.f32 %v359, %v379
    %v389 = vmul.f32 %v360, %v384
    %v390 = vadd.f32 %v386, %v387
    %v391 = vadd.f32 %v390, %v388
    %v392 = vadd.f32 %v391, %v389
    %v393 = vrot.slane %v392, 4
    %v394 = vadd.f32 %v392, %v393
    %v395 = vrot.slane %v394, 2
    %v396 = vadd.f32 %v394, %v395
    %v397 = vrot.slane %v396, 1
    %v398 = vadd.f32 %v396, %v397
    %400 = vset.pattern.permute.xlu0 0
    %401 = vperm.xlu0 %400, %v365
    %v402 = vpop.permute.xlu0 %401
    %v404 = vlaneseq
    %v405 = vshrl.u32 %v404, 7
    %v406 = vsub.s32 0, %v405
    %v407 = vrot.slane %v402, %v406
    %v408 = vadd.f32 %v398, %v407
    %409 = vst [vmem:[#allocation3] sm:$0x1] %v408
    // Predicated region
    $region30: #{tpu_custom_call.1} parent=1 // pred_check
      _
    $region31: #{tpu_custom_call.1} parent=1 // pred_check_branch
      %411 = sbr.rel (0) target = $region33
    $region32: #{tpu_custom_call.1} parent=1 // pred_region
      %s413 = ssub.s32 16, 16
      %414 = vsyncadd [#allocation4], %s413
      %s416 = sshll.u32 [#allocation3], 4
      %s417 = int_to_ptr.vmem [resolvable:$true] %s416
      %419 = dma.vmem_to_hbm [thread:$0]  %s417, 16, %s7, [#allocation4]
    $region33: #{tpu_custom_call.1} parent=1 // pred_fallthru
      _
    // Predicated region
    $region34: #{tpu_custom_call.1} parent=1 // pred_check
      _
    $region35: #{tpu_custom_call.1} parent=1 // pred_check_branch
      %421 = sbr.rel (0) target = $region37
    $region36: #{tpu_custom_call.1} parent=1 // pred_region
      %422 = dma.done [#allocation4], 16
    $region37: #{tpu_custom_call.1} parent=1 // pred_fallthru
      _
    %423 = vsyncpa [#allocation4], 1

</llo_original>
